<compile_context>
chip_gen: v7x
topology: tpu7x:2x2x1
jax: 0.10.0
libtpu: 0.0.40
codegen_flags: <defaults>
</compile_context>

<pallas_src>
import jax
import jax.numpy as jnp
from jax.experimental import pallas as pl
from jax.experimental.pallas import tpu as pltpu  # noqa: F401  (TPU backend import)


def policy_kernel(x_ref, p_ref, mu_ref, sigma_ref):
    # x: (B, 3) f32, p: (4, 2) f32  [rows 0..2 = fused weight, row 3 = fused bias]
    x = x_ref[...]
    p = p_ref[...]

    # Fused affine map as 3 broadcasted VPU FMAs + bias (no MXU, no hidden tensor).
    out = (x[:, 0:1] * p[0:1, :]
           + x[:, 1:2] * p[1:2, :]
           + x[:, 2:3] * p[2:3, :]
           + p[3:4, :])                                   # (B, 2) f32

    # Split into the two module outputs in-kernel (no wrapper-side slices/adds).
    mu_ref[...] = out[:, 0:1].astype(mu_ref.dtype)
    sigma_ref[...] = out[:, 1:2].astype(sigma_ref.dtype)


def fuse_params(params):
    """Collapse Linear(3,128) -> {Linear(128,1), Linear(128,1)} into one (3->2)
    affine map. Do this once per parameter update (cheap XLA ops), not per call."""
    w1, b1, w_heads, b_heads = params
    w_fused = w1 @ w_heads                    # (3, 2)
    b_fused = b1 @ w_heads + b_heads          # (1, 2)
    return jnp.concatenate([w_fused, b_fused], axis=0)   # (4, 2), ~32 B


def policy_forward(x, fused_p):
    """x: (B, 3) float32, fused_p: (4, 2) float32. Returns (mu, sigma), each (B, 1)."""
    B = x.shape[0]

    # Single grid point; every operand's block is its full array shape
    # (total footprint is well under 1 KiB, so no tiling/pipelining/grid needed).
    full = lambda a: pl.BlockSpec(a.shape, lambda: (0,) * a.ndim)

    cost = pl.CostEstimate(
        flops=2 * B * 3 * 2 + B * 2,          # 3 FMAs per output column + bias
        transcendentals=0,
        bytes_accessed=4 * (B * 3 + 4 * 2 + 2 * B),
    )

    mu, sigma = pl.pallas_call(
        policy_kernel,
        out_shape=(jax.ShapeDtypeStruct((B, 1), jnp.float32),
                   jax.ShapeDtypeStruct((B, 1), jnp.float32)),
        in_specs=[full(x), full(fused_p)],
        out_specs=(pl.BlockSpec((B, 1), lambda: (0, 0)),
                   pl.BlockSpec((B, 1), lambda: (0, 0))),
        cost_estimate=cost,
    )(x, fused_p)
    return mu, sigma


def init_params(key):
    """Deterministic init mimicking PyTorch Linear's U(-1/sqrt(fan_in), 1/sqrt(fan_in)).
    Weights stored as (in_features, out_features); the two heads are pre-fused
    into a single (128, 2) weight / (1, 2) bias."""
    k1, k2, k3, k4, k5, k6 = jax.random.split(key, 6)

    def lin(kw, kb, fan_in, fan_out):
        bound = 1.0 / jnp.sqrt(fan_in)
        w = jax.random.uniform(kw, (fan_in, fan_out), jnp.float32, -bound, bound)
        b = jax.random.uniform(kb, (1, fan_out), jnp.float32, -bound, bound)
        return w, b

    w1, b1 = lin(k1, k2, 3, 128)        # l1: Linear(3, 128)
    wmu, bmu = lin(k3, k4, 128, 1)      # mu: Linear(128, 1)
    wsig, bsig = lin(k5, k6, 128, 1)    # sigma: Linear(128, 1)

    w_heads = jnp.concatenate([wmu, wsig], axis=1)   # (128, 2)
    b_heads = jnp.concatenate([bmu, bsig], axis=1)   # (1, 2)
    return (w1, b1, w_heads, b_heads)


if __name__ == "__main__":
    key = jax.random.PRNGKey(0)
    kx, kp = jax.random.split(key)

    B = 8  # small batch
    x = jax.random.normal(kx, (B, 3), dtype=jnp.float32)
    params = init_params(kp)

    fused_p = fuse_params(params)                     # once per parameter update
    mu, sigma = policy_forward(x, fused_p)
    jax.block_until_ready((mu, sigma))

    # Cross-check against the layer-by-layer JAX reference (same math as the
    # PyTorch forward). The algebraic fusion only changes FP summation order,
    # so tolerances are loosened slightly per the review.
    w1, b1, w_heads, b_heads = params
    h_ref = x @ w1 + b1
    mu_ref = h_ref @ w_heads[:, 0:1] + b_heads[:, 0:1]
    sigma_ref = h_ref @ w_heads[:, 1:2] + b_heads[:, 1:2]
    assert mu.shape == (B, 1) and sigma.shape == (B, 1)
    assert jnp.allclose(mu, mu_ref, atol=1e-4, rtol=1e-4)
    assert jnp.allclose(sigma, sigma_ref, atol=1e-4, rtol=1e-4)

    # TODO(synk): sigma head is raw linear (can be negative) — exactly matches the
    # given PyTorch module, which applies no softplus/exp in forward().
    print("KERNEL_OK")
</pallas_src>

<mosaic_0001>
module attributes {stable_mosaic.version = 11 : i64} {
  func.func @policy_kernel(%arg0: memref<8x3xf32, #tpu.memory_space<vmem>>, %arg1: memref<4x2xf32, #tpu.memory_space<vmem>>, %arg2: memref<8x1xf32, #tpu.memory_space<vmem>>, %arg3: memref<8x1xf32, #tpu.memory_space<vmem>>) attributes {dimension_semantics = [], scalar_prefetch = 0 : i64, scratch_operands = 0 : i64, tpu.core_type = #tpu.core_type<tc>} {
    %c0 = arith.constant 0 : index
    %c0_0 = arith.constant 0 : index
    %0 = vector.load %arg0[%c0, %c0_0] : memref<8x3xf32, #tpu.memory_space<vmem>>, vector<8x3xf32>
    %c0_1 = arith.constant 0 : index
    %c0_2 = arith.constant 0 : index
    %1 = vector.load %arg1[%c0_1, %c0_2] : memref<4x2xf32, #tpu.memory_space<vmem>>, vector<4x2xf32>
    %2 = vector.extract_strided_slice %0 {offsets = [0, 0], sizes = [8, 1], strides = [1, 1]} : vector<8x3xf32> to vector<8x1xf32>
    %3 = vector.extract_strided_slice %1 {offsets = [0, 0], sizes = [1, 2], strides = [1, 1]} : vector<4x2xf32> to vector<1x2xf32>
    %4 = vector.broadcast %2 : vector<8x1xf32> to vector<8x2xf32>
    %5 = vector.broadcast %3 : vector<1x2xf32> to vector<8x2xf32>
    %6 = arith.mulf %4, %5 : vector<8x2xf32>
    %7 = vector.extract_strided_slice %0 {offsets = [0, 1], sizes = [8, 1], strides = [1, 1]} : vector<8x3xf32> to vector<8x1xf32>
    %8 = vector.extract_strided_slice %1 {offsets = [1, 0], sizes = [1, 2], strides = [1, 1]} : vector<4x2xf32> to vector<1x2xf32>
    %9 = vector.broadcast %7 : vector<8x1xf32> to vector<8x2xf32>
    %10 = vector.broadcast %8 : vector<1x2xf32> to vector<8x2xf32>
    %11 = arith.mulf %9, %10 : vector<8x2xf32>
    %12 = arith.addf %6, %11 : vector<8x2xf32>
    %13 = vector.extract_strided_slice %0 {offsets = [0, 2], sizes = [8, 1], strides = [1, 1]} : vector<8x3xf32> to vector<8x1xf32>
    %14 = vector.extract_strided_slice %1 {offsets = [2, 0], sizes = [1, 2], strides = [1, 1]} : vector<4x2xf32> to vector<1x2xf32>
    %15 = vector.broadcast %13 : vector<8x1xf32> to vector<8x2xf32>
    %16 = vector.broadcast %14 : vector<1x2xf32> to vector<8x2xf32>
    %17 = arith.mulf %15, %16 : vector<8x2xf32>
    %18 = arith.addf %12, %17 : vector<8x2xf32>
    %19 = vector.extract_strided_slice %1 {offsets = [3, 0], sizes = [1, 2], strides = [1, 1]} : vector<4x2xf32> to vector<1x2xf32>
    %20 = vector.broadcast %19 : vector<1x2xf32> to vector<8x2xf32>
    %21 = arith.addf %18, %20 : vector<8x2xf32>
    %22 = vector.extract_strided_slice %21 {offsets = [0, 0], sizes = [8, 1], strides = [1, 1]} : vector<8x2xf32> to vector<8x1xf32>
    %c0_3 = arith.constant 0 : index
    %c0_4 = arith.constant 0 : index
    %23 = vector.load %arg2[%c0_3, %c0_4] : memref<8x1xf32, #tpu.memory_space<vmem>>, vector<8x1xf32>
    tpu.vector_store %arg2[%c0_3, %c0_4], %22 {strides = array<i32>} : memref<8x1xf32, #tpu.memory_space<vmem>>, vector<8x1xf32>,
    %24 = vector.extract_strided_slice %21 {offsets = [0, 1], sizes = [8, 1], strides = [1, 1]} : vector<8x2xf32> to vector<8x1xf32>
    %c0_5 = arith.constant 0 : index
    %c0_6 = arith.constant 0 : index
    %25 = vector.load %arg3[%c0_5, %c0_6] : memref<8x1xf32, #tpu.memory_space<vmem>>, vector<8x1xf32>
    tpu.vector_store %arg3[%c0_5, %c0_6], %24 {strides = array<i32>} : memref<8x1xf32, #tpu.memory_space<vmem>>, vector<8x1xf32>,
    return
  }
}

</mosaic_0001>

<llo_original>
// kernel: tpu_custom_call.1
$region0: #{tpu_custom_call.1}
  #allocation0 [shape = 'u32[]', space=smem, size = 0x4, offset = 0x4, fixed_abs, tag = 'smem constant byte address 0x4 - core index']
  #allocation1 [shape = 'u32[144,128]{1,0:T(1,128)}', space=vmem, size = 0x12000, scoped, tag = 'internal scratch']
  %s0 = inlined_call_operand.vmem [shape: f32[8,3], index: 0, kind: input, shape index: {}]
  %s1 = inlined_call_operand.vmem [shape: f32[4,2], index: 1, kind: input, shape index: {}]
  %s2 = inlined_call_operand.vmem [shape: f32[8,1], index: 2, kind: output, shape index: {0}]
  %s3 = inlined_call_operand.vmem [shape: f32[8,1], index: 3, kind: output, shape index: {1}]
  %4 = xla_tuple %s2, %s3
  %s5 = sld [smem:[#allocation0]]
  $region26: #{tpu_custom_call.1} parent=0
    _
  %s7 = ssub.s32 1, %s5
  %s8 = scalar_select 0, %s7, %s5
  // Predicated region
  $region2: #{tpu_custom_call.1} parent=0 // pred_check
    _
  $region3: #{tpu_custom_call.1} parent=0 // pred_check_branch
    %10 = sbr.rel (0) target = $region5
  $region4: #{tpu_custom_call.1} parent=0 // pred_region
    _
  $region5: #{tpu_custom_call.1} parent=0 // pred_fallthru
    _
  // Predicated region
  $region6: #{tpu_custom_call.1} parent=0 // pred_check
    _
  $region7: #{tpu_custom_call.1} parent=0 // pred_check_branch
    %12 = sbr.rel (0) target = $region9
  $region8: #{tpu_custom_call.1} parent=0 // pred_region
    _
  $region9: #{tpu_custom_call.1} parent=0 // pred_fallthru
    _
  %v13 = vld [vmem:[%s0] sm:$0xff]
  %v14 = vld [vmem:[%s1] sm:$0xf]
  %16 = vset.pattern.permute.xlu0 0
  %17 = vperm.xlu0 %16, %v13
  %v18 = vpop.permute.xlu0 %17
  %v20 = vlaneseq
  %v21 = vshrl.u32 %v20, 7
  %v22 = vsub.s32 0, %v21
  %v23 = vrot.slane %v14, %v22
  %v24 = vmul.f32 %v18, %v23
  %25 = vset.pattern.permute.xlu0 1
  %26 = vperm.xlu0 %25, %v13
  %v27 = vpop.permute.xlu0 %26
  %v29 = vlaneseq
  %v30 = vshrl.u32 %v29, 7
  %v31 = vsub.s32 1, %v30
  %v32 = vrot.slane %v14, %v31
  %v33 = vmul.f32 %v27, %v32
  %v34 = vadd.f32 %v24, %v33
  %35 = vset.pattern.permute.xlu0 2
  %36 = vperm.xlu0 %35, %v13
  %v37 = vpop.permute.xlu0 %36
  %v39 = vlaneseq
  %v40 = vshrl.u32 %v39, 7
  %v41 = vsub.s32 2, %v40
  %v42 = vrot.slane %v14, %v41
  %v43 = vmul.f32 %v37, %v42
  %v44 = vadd.f32 %v34, %v43
  %v45 = vlaneseq
  %v46 = vshrl.u32 %v45, 7
  %v47 = vsub.s32 3, %v46
  %v48 = vrot.slane %v14, %v47
  %v49 = vadd.f32 %v44, %v48
  %vm50 = vcmask 7168
  %51 = vst.msk [vmem:[%s2] sm:$0xff] %vm50, %v49
  %53 = vrot.lane.b32.xlu0 %v49, 127
  %v54 = vpop.permute.xlu0 %53
  %56 = vst.msk [vmem:[%s3] sm:$0xff] %vm50, %v54
  // Predicated region
  $region10: #{tpu_custom_call.1} parent=0 // pred_check
    _
  $region11: #{tpu_custom_call.1} parent=0 // pred_check_branch
    %58 = sbr.rel (0) target = $region13
  $region12: #{tpu_custom_call.1} parent=0 // pred_region
    _
  $region13: #{tpu_custom_call.1} parent=0 // pred_fallthru
    _
  // Predicated region
  $region14: #{tpu_custom_call.1} parent=0 // pred_check
    _
  $region15: #{tpu_custom_call.1} parent=0 // pred_check_branch
    %60 = sbr.rel (0) target = $region17
  $region16: #{tpu_custom_call.1} parent=0 // pred_region
    _
  $region17: #{tpu_custom_call.1} parent=0 // pred_fallthru
    _
  // Predicated region
  $region18: #{tpu_custom_call.1} parent=0 // pred_check
    _
  $region19: #{tpu_custom_call.1} parent=0 // pred_check_branch
    %62 = sbr.rel (0) target = $region21
  $region20: #{tpu_custom_call.1} parent=0 // pred_region
    _
  $region21: #{tpu_custom_call.1} parent=0 // pred_fallthru
    _
  // Predicated region
  $region22: #{tpu_custom_call.1} parent=0 // pred_check
    _
  $region23: #{tpu_custom_call.1} parent=0 // pred_check_branch
    %64 = sbr.rel (0) target = $region25
  $region24: #{tpu_custom_call.1} parent=0 // pred_region
    _
  $region25: #{tpu_custom_call.1} parent=0 // pred_fallthru
    _

</llo_original>
